<compile_context>
chip_gen: v5e
topology: v5e:2x2
jax: 0.10.0
libtpu: 0.0.40
codegen_flags: <defaults>
</compile_context>

<pallas_src>
import functools

import jax
import jax.numpy as jnp
from jax import lax
from jax.experimental import pallas as pl
from jax.experimental.pallas import tpu as pltpu


def _round_up(x, m):
    return ((x + m - 1) // m) * m


def _vkg_kernel(tag_ref, vk_ref, vke_ref, out_ref, w_ref, *, sub_rows):
    # tag_ref: [TB, E], vk_ref: [K, E], vke_ref: [TB, K*E]
    K, E = vk_ref.shape
    TB = tag_ref.shape[0]

    # scores = tag_emb @ vk_emb.T -> [TB, K]  (MXU, f32 accumulate; storage
    # dtype feeds the MXU directly, no VPU pre-cast pass).
    scores = lax.dot_general(
        tag_ref[...], vk_ref[...],
        dimension_numbers=(((1,), (1,)), ((), ())),
        preferred_element_type=jnp.float32,
    )

    # Exact softmax over the vk_num axis (weights are a user-visible output;
    # the [TB,1] divide is free under the HBM-bound DMA).
    m = jnp.max(scores, axis=1, keepdims=True)
    e = jnp.exp(scores - m)
    denom = jnp.sum(e, axis=1, keepdims=True)
    weights = e / denom                                   # [TB, K] f32
    w_ref[...] = weights

    # Mixture: sum_k weights[:, k] * vke[:, k, :], f32-accumulated.
    # Sub-chunk the batch rows so the accumulator fits in vregs (<= ~32):
    # one lax.fori_loop iteration owns [sub_rows, E] f32 and does a single
    # store to out_ref — no spilled [TB, E] live range.
    n_sub = TB // sub_rows

    def body(c, carry):
        row0 = pl.multiple_of(c * sub_rows, sub_rows)
        w_sub = w_ref[pl.ds(row0, sub_rows), :]           # [sub, K] f32
        acc = None
        for k in range(K):
            slab = vke_ref[pl.ds(row0, sub_rows),
                           k * E:(k + 1) * E].astype(jnp.float32)
            term = w_sub[:, k:k + 1] * slab
            acc = term if acc is None else acc + term
        out_ref[pl.ds(row0, sub_rows), :] = acc.astype(out_ref.dtype)
        return carry

    lax.fori_loop(0, n_sub, body, 0)


def vkg_layer(tag_emb, vk_emb, vke_outputs, *, batch_tile=None):
    """Pallas implementation of VKGLayer.forward.

    Args:
      tag_emb:     [B, E]
      vk_emb:      [K, E]
      vke_outputs: [B, K, E]
    Returns:
      (output [B, E] in vke_outputs.dtype, weights [B, K] in float32)
    """
    B, E = tag_emb.shape
    K, E2 = vk_emb.shape
    assert E == E2 and vke_outputs.shape == (B, K, E)

    out_dtype = vke_outputs.dtype
    isz = lambda d: jnp.dtype(d).itemsize

    # Generation-aware VMEM budgeting (64 MiB/TC on v7x, 128 MiB on v5e/v6e).
    try:
        vmem_cap = int(pltpu.get_tpu_info().vmem_capacity_bytes)
    except Exception:
        vmem_cap = 64 * 1024 * 1024          # conservative (v7x-sized) fallback
    vmem_budget = max(16 << 20, vmem_cap - (24 << 20))   # 40 MiB / 104 MiB
    vmem_limit = max(32 << 20, vmem_cap - (8 << 20))     # 56 MiB / 120 MiB

    # Double-buffered per-row VMEM cost across all tiled operands.
    per_row = 2 * (E * isz(tag_emb.dtype)        # tag tile
                   + K * E * isz(vke_outputs.dtype)   # vke tile (dominant)
                   + E * isz(out_dtype)          # output tile
                   + K * 4)                      # weights tile (f32)
    resident = 2 * K * E * isz(vk_emb.dtype)     # vk_emb (same block every step)

    # Rows per in-kernel sub-chunk: keep the f32 accumulator within ~32 vregs
    # (rows * E * 4B <= 32 * 4KiB  =>  rows <= 32768 / E), multiple of 8.
    sub_rows = max(8, min(512, ((32768 // max(E, 1)) // 8) * 8))

    if batch_tile is None:
        batch_tile = (vmem_budget - resident) // max(per_row, 1)
        batch_tile = int(max(8, min(batch_tile, 4096)))

    tb = min(batch_tile, _round_up(B, 8))
    tb = max(8, (tb // 8) * 8)
    if tb >= sub_rows:
        tb = (tb // sub_rows) * sub_rows         # sub_rows must divide the tile
    else:
        sub_rows = tb

    # No padding of the [B,K,E] tensor: ragged batches go through Pallas'
    # masked edge-block handling (grid = cdiv, overhang writes are dropped).
    grid = (pl.cdiv(B, tb),)

    KE = K * E
    vke_2d = vke_outputs.reshape(B, KE)          # contiguous -> free reshape

    kernel = functools.partial(_vkg_kernel, sub_rows=sub_rows)

    out, w = pl.pallas_call(
        kernel,
        out_shape=(
            jax.ShapeDtypeStruct((B, E), out_dtype),
            jax.ShapeDtypeStruct((B, K), jnp.float32),
        ),
        grid_spec=pltpu.PrefetchScalarGridSpec(
            num_scalar_prefetch=0,
            grid=grid,
            in_specs=[
                pl.BlockSpec((tb, E), lambda i: (i, 0)),     # tag tile
                pl.BlockSpec((K, E), lambda i: (0, 0)),      # vk_emb (resident)
                pl.BlockSpec((tb, KE), lambda i: (i, 0)),    # vke tile, lane-dense
            ],
            out_specs=[
                pl.BlockSpec((tb, E), lambda i: (i, 0)),     # output
                pl.BlockSpec((tb, K), lambda i: (i, 0)),     # weights (f32)
            ],
        ),
        compiler_params=pltpu.CompilerParams(
            # Batch axis is embarrassingly parallel -> megacore sharding.
            dimension_semantics=("parallel",),
            vmem_limit_bytes=int(vmem_limit),
        ),
    )(tag_emb, vk_emb, vke_2d)
    return out, w


def _reference(tag_emb, vk_emb, vke_outputs):
    scores = tag_emb.astype(jnp.float32) @ vk_emb.astype(jnp.float32).T
    weights = jax.nn.softmax(scores, axis=1)
    output = jnp.einsum("bk,bke->be", weights, vke_outputs.astype(jnp.float32))
    return output, weights


if __name__ == "__main__":
    key = jax.random.PRNGKey(0)

    # Case 1: tile-aligned batch.
    B, K, E = 16, 8, 128          # batch, vk_num, emb_size
    k1, k2, k3 = jax.random.split(key, 3)
    tag_emb = jax.random.normal(k1, (B, E), dtype=jnp.float32)
    vk_emb = jax.random.normal(k2, (K, E), dtype=jnp.float32)
    vke_outputs = jax.random.normal(k3, (B, K, E), dtype=jnp.float32)

    output, weights = vkg_layer(tag_emb, vk_emb, vke_outputs)
    jax.block_until_ready((output, weights))

    ref_out, ref_w = _reference(tag_emb, vk_emb, vke_outputs)
    assert jnp.allclose(output, ref_out, atol=2e-3, rtol=2e-3)
    assert jnp.allclose(weights, ref_w, atol=2e-3, rtol=2e-3)
    assert jnp.allclose(jnp.sum(weights, axis=1), 1.0, atol=1e-4)

    # Case 2: ragged batch (B not a multiple of the tile) — exercises the
    # no-padding edge-block path (last block partially valid, writes dropped).
    B2 = 40
    k4, k5 = jax.random.split(k3)
    tag2 = jax.random.normal(k4, (B2, E), dtype=jnp.float32)
    vke2 = jax.random.normal(k5, (B2, K, E), dtype=jnp.float32)
    out2, w2 = vkg_layer(tag2, vk_emb, vke2, batch_tile=16)
    jax.block_until_ready((out2, w2))
    ref_out2, ref_w2 = _reference(tag2, vk_emb, vke2)
    assert jnp.allclose(out2, ref_out2, atol=2e-3, rtol=2e-3)
    assert jnp.allclose(w2, ref_w2, atol=2e-3, rtol=2e-3)

    print("KERNEL_OK")
</pallas_src>

<mosaic_0001>
module attributes {stable_mosaic.version = 11 : i64} {
  func.func @_vkg_kernel(%arg0: i32, %arg1: memref<16x128xf32, #tpu.memory_space<vmem>>, %arg2: memref<8x128xf32, #tpu.memory_space<vmem>>, %arg3: memref<16x1024xf32, #tpu.memory_space<vmem>>, %arg4: memref<16x128xf32, #tpu.memory_space<vmem>>, %arg5: memref<16x8xf32, #tpu.memory_space<vmem>>) attributes {dimension_semantics = [#tpu.dimension_semantics<parallel>], iteration_bounds = array<i64: 1>, scalar_prefetch = 0 : i64, scratch_operands = 0 : i64, tpu.core_type = #tpu.core_type<tc>, window_params = [{transform_indices = @transform_0, window_bounds = array<i64: 16, 128>}, {pipeline_mode = #tpu.pipeline_mode<synchronous>, transform_indices = @transform_1, window_bounds = array<i64: 8, 128>}, {transform_indices = @transform_2, window_bounds = array<i64: 16, 1024>}, {transform_indices = @transform_3, window_bounds = array<i64: 16, 128>}, {transform_indices = @transform_4, window_bounds = array<i64: 16, 8>}]} {
    %c0 = arith.constant 0 : index
    %c0_0 = arith.constant 0 : index
    %0 = vector.load %arg1[%c0, %c0_0] : memref<16x128xf32, #tpu.memory_space<vmem>>, vector<16x128xf32>
    %c0_1 = arith.constant 0 : index
    %c0_2 = arith.constant 0 : index
    %1 = vector.load %arg2[%c0_1, %c0_2] : memref<8x128xf32, #tpu.memory_space<vmem>>, vector<8x128xf32>
    %cst = arith.constant dense<0.000000e+00> : vector<16x8xf32>
    %2 = tpu.matmul %0, %1, %cst {dimension_numbers = #tpu.dot_dimension_numbers<[1], [1], [0], [0], [0, 0, 1, 0], [], []>} : vector<16x128xf32>, vector<8x128xf32>, vector<16x8xf32> -> vector<16x8xf32>
    %cst_3 = arith.constant dense<0xFF800000> : vector<16xf32>
    %3 = vector.multi_reduction <maximumf>, %2, %cst_3 [1] : vector<16x8xf32> to vector<16xf32>
    %4 = vector.shape_cast %3 : vector<16xf32> to vector<16x1xf32>
    %5 = vector.broadcast %4 : vector<16x1xf32> to vector<16x8xf32>
    %6 = arith.subf %2, %5 : vector<16x8xf32>
    %7 = math.exp %6 : vector<16x8xf32>
    %cst_4 = arith.constant dense<0.000000e+00> : vector<16xf32>
    %8 = vector.multi_reduction <add>, %7, %cst_4 [1] : vector<16x8xf32> to vector<16xf32>
    %9 = vector.shape_cast %8 : vector<16xf32> to vector<16x1xf32>
    %10 = vector.broadcast %9 : vector<16x1xf32> to vector<16x8xf32>
    %11 = arith.divf %7, %10 : vector<16x8xf32>
    %c0_5 = arith.constant 0 : index
    %c0_6 = arith.constant 0 : index
    %12 = vector.load %arg5[%c0_5, %c0_6] : memref<16x8xf32, #tpu.memory_space<vmem>>, vector<16x8xf32>
    tpu.vector_store %arg5[%c0_5, %c0_6], %11 {strides = array<i32>} : memref<16x8xf32, #tpu.memory_space<vmem>>, vector<16x8xf32>,
    %c0_i32 = arith.constant 0 : i32
    %c16_i32 = arith.constant 16 : i32
    %13 = arith.muli %c0_i32, %c16_i32 : i32
    %14 = tpu.assume_multiple %13, 16 : i32
    %15 = arith.index_cast %14 : i32 to index
    %c0_7 = arith.constant 0 : index
    %16 = vector.load %arg5[%15, %c0_7] : memref<16x8xf32, #tpu.memory_space<vmem>>, vector<16x8xf32>
    %17 = arith.index_cast %14 : i32 to index
    %c0_8 = arith.constant 0 : index
    %18 = vector.load %arg3[%17, %c0_8] : memref<16x1024xf32, #tpu.memory_space<vmem>>, vector<16x128xf32>
    %19 = vector.extract_strided_slice %16 {offsets = [0, 0], sizes = [16, 1], strides = [1, 1]} : vector<16x8xf32> to vector<16x1xf32>
    %20 = vector.broadcast %19 : vector<16x1xf32> to vector<16x128xf32>
    %21 = arith.mulf %20, %18 : vector<16x128xf32>
    %22 = arith.index_cast %14 : i32 to index
    %c128 = arith.constant 128 : index
    %23 = vector.load %arg3[%22, %c128] : memref<16x1024xf32, #tpu.memory_space<vmem>>, vector<16x128xf32>
    %24 = vector.extract_strided_slice %16 {offsets = [0, 1], sizes = [16, 1], strides = [1, 1]} : vector<16x8xf32> to vector<16x1xf32>
    %25 = vector.broadcast %24 : vector<16x1xf32> to vector<16x128xf32>
    %26 = arith.mulf %25, %23 : vector<16x128xf32>
    %27 = arith.addf %21, %26 : vector<16x128xf32>
    %28 = arith.index_cast %14 : i32 to index
    %c256 = arith.constant 256 : index
    %29 = vector.load %arg3[%28, %c256] : memref<16x1024xf32, #tpu.memory_space<vmem>>, vector<16x128xf32>
    %30 = vector.extract_strided_slice %16 {offsets = [0, 2], sizes = [16, 1], strides = [1, 1]} : vector<16x8xf32> to vector<16x1xf32>
    %31 = vector.broadcast %30 : vector<16x1xf32> to vector<16x128xf32>
    %32 = arith.mulf %31, %29 : vector<16x128xf32>
    %33 = arith.addf %27, %32 : vector<16x128xf32>
    %34 = arith.index_cast %14 : i32 to index
    %c384 = arith.constant 384 : index
    %35 = vector.load %arg3[%34, %c384] : memref<16x1024xf32, #tpu.memory_space<vmem>>, vector<16x128xf32>
    %36 = vector.extract_strided_slice %16 {offsets = [0, 3], sizes = [16, 1], strides = [1, 1]} : vector<16x8xf32> to vector<16x1xf32>
    %37 = vector.broadcast %36 : vector<16x1xf32> to vector<16x128xf32>
    %38 = arith.mulf %37, %35 : vector<16x128xf32>
    %39 = arith.addf %33, %38 : vector<16x128xf32>
    %40 = arith.index_cast %14 : i32 to index
    %c512 = arith.constant 512 : index
    %41 = vector.load %arg3[%40, %c512] : memref<16x1024xf32, #tpu.memory_space<vmem>>, vector<16x128xf32>
    %42 = vector.extract_strided_slice %16 {offsets = [0, 4], sizes = [16, 1], strides = [1, 1]} : vector<16x8xf32> to vector<16x1xf32>
    %43 = vector.broadcast %42 : vector<16x1xf32> to vector<16x128xf32>
    %44 = arith.mulf %43, %41 : vector<16x128xf32>
    %45 = arith.addf %39, %44 : vector<16x128xf32>
    %46 = arith.index_cast %14 : i32 to index
    %c640 = arith.constant 640 : index
    %47 = vector.load %arg3[%46, %c640] : memref<16x1024xf32, #tpu.memory_space<vmem>>, vector<16x128xf32>
    %48 = vector.extract_strided_slice %16 {offsets = [0, 5], sizes = [16, 1], strides = [1, 1]} : vector<16x8xf32> to vector<16x1xf32>
    %49 = vector.broadcast %48 : vector<16x1xf32> to vector<16x128xf32>
    %50 = arith.mulf %49, %47 : vector<16x128xf32>
    %51 = arith.addf %45, %50 : vector<16x128xf32>
    %52 = arith.index_cast %14 : i32 to index
    %c768 = arith.constant 768 : index
    %53 = vector.load %arg3[%52, %c768] : memref<16x1024xf32, #tpu.memory_space<vmem>>, vector<16x128xf32>
    %54 = vector.extract_strided_slice %16 {offsets = [0, 6], sizes = [16, 1], strides = [1, 1]} : vector<16x8xf32> to vector<16x1xf32>
    %55 = vector.broadcast %54 : vector<16x1xf32> to vector<16x128xf32>
    %56 = arith.mulf %55, %53 : vector<16x128xf32>
    %57 = arith.addf %51, %56 : vector<16x128xf32>
    %58 = arith.index_cast %14 : i32 to index
    %c896 = arith.constant 896 : index
    %59 = vector.load %arg3[%58, %c896] : memref<16x1024xf32, #tpu.memory_space<vmem>>, vector<16x128xf32>
    %60 = vector.extract_strided_slice %16 {offsets = [0, 7], sizes = [16, 1], strides = [1, 1]} : vector<16x8xf32> to vector<16x1xf32>
    %61 = vector.broadcast %60 : vector<16x1xf32> to vector<16x128xf32>
    %62 = arith.mulf %61, %59 : vector<16x128xf32>
    %63 = arith.addf %57, %62 : vector<16x128xf32>
    %64 = arith.index_cast %14 : i32 to index
    %c0_9 = arith.constant 0 : index
    %65 = vector.load %arg4[%64, %c0_9] : memref<16x128xf32, #tpu.memory_space<vmem>>, vector<16x128xf32>
    tpu.vector_store %arg4[%64, %c0_9], %63 {strides = array<i32>} : memref<16x128xf32, #tpu.memory_space<vmem>>, vector<16x128xf32>,
    %c1_i32 = arith.constant 1 : i32
    return
  }
  func.func @transform_0(%arg0: i32) -> (i32, i32) {
    %c0_i32 = arith.constant 0 : i32
    %c0_i32_0 = arith.constant 0 : i32
    return %arg0, %c0_i32 : i32, i32
  }
  func.func @transform_1(%arg0: i32) -> (i32, i32) {
    %c0_i32 = arith.constant 0 : i32
    %c0_i32_0 = arith.constant 0 : i32
    %c0_i32_1 = arith.constant 0 : i32
    return %c0_i32, %c0_i32_0 : i32, i32
  }
  func.func @transform_2(%arg0: i32) -> (i32, i32) {
    %c0_i32 = arith.constant 0 : i32
    %c0_i32_0 = arith.constant 0 : i32
    return %arg0, %c0_i32 : i32, i32
  }
  func.func @transform_3(%arg0: i32) -> (i32, i32) {
    %c0_i32 = arith.constant 0 : i32
    %c0_i32_0 = arith.constant 0 : i32
    return %arg0, %c0_i32 : i32, i32
  }
  func.func @transform_4(%arg0: i32) -> (i32, i32) {
    %c0_i32 = arith.constant 0 : i32
    %c0_i32_0 = arith.constant 0 : i32
    return %arg0, %c0_i32 : i32, i32
  }
}

</mosaic_0001>

<llo_original>
// kernel: tpu_custom_call.1
$region0: #{tpu_custom_call.1}
  #allocation0 [shape = 'u32[]', space=smem, size = 0x4, offset = 0x4, fixed_abs, tag = 'smem constant byte address 0x4 - core index']
  #allocation1 [shape = 'u32[72,128]{1,0:T(1,128)}', space=vmem, size = 0x9000, scoped, tag = 'internal scratch']
  %s0 = inlined_call_operand.hbm [shape: f32[16,128], index: 0, kind: input, shape index: {}]
  %s1 = inlined_call_operand.hbm [shape: f32[8,128], index: 1, kind: input, shape index: {}]
  %s2 = inlined_call_operand.hbm [shape: f32[16,1024], index: 2, kind: input, shape index: {}]
  %s3 = inlined_call_operand.hbm [shape: f32[16,128], index: 3, kind: output, shape index: {0}]
  %s4 = inlined_call_operand.vmem [shape: f32[16,8], index: 4, kind: output, shape index: {1}]
  %5 = xla_tuple %s3, %s4
  %s6 = sld [smem:[#allocation0]]
  $region42: #{tpu_custom_call.1} parent=0
    _
  %s8 = ssub.s32 1, %s6
  %s9 = scalar_select 0, %s8, %s6
  $region1: #{tpu_custom_call.1} parent=0
    #allocation2 [shape = 'u8[8192]{0}', space=vmem, size = 0x2000, scoped, tag = 'input window, operand 0, single buffered']
    #allocation3 [shape = 's32[1]{0}', space=sflag, size = 0x4, scoped, tag = 'scoped memory for tpu_custom_call.1']
    #allocation4 [shape = 's32[1]{0}', space=sflag, size = 0x4, scoped, tag = 'scoped memory for tpu_custom_call.1']
    #allocation5 [shape = 'u8[4096]{0}', space=vmem, size = 0x1000, scoped, tag = 'input window, operand 1, single buffered']
    #allocation6 [shape = 's32[1]{0}', space=sflag, size = 0x4, scoped, tag = 'scoped memory for tpu_custom_call.1']
    #allocation7 [shape = 'u8[65536]{0}', space=vmem, size = 0x10000, scoped, tag = 'input window, operand 2, single buffered']
    #allocation8 [shape = 'u8[8192]{0}', space=vmem, size = 0x2000, scoped, tag = 'output window, operand 0, single buffered']
    %10 = vsyncpa [#allocation3], 0
    %11 = vsyncpa [#allocation6], 0
    %12 = vsyncpa [#allocation4], 0
    // Predicated region
    $region2: #{tpu_custom_call.1} parent=1 // pred_check
      _
    $region3: #{tpu_custom_call.1} parent=1 // pred_check_branch
      %14 = sbr.rel (0) target = $region5
    $region4: #{tpu_custom_call.1} parent=1 // pred_region
      %16 = vsyncadd [#allocation3], 0
      %s17 = sshll.u32 %s0, 4
      %s18 = int_to_ptr.hbm [resolvable:$true] %s17
      %s19 = sshll.u32 [#allocation2], 4
      %s20 = int_to_ptr.vmem [resolvable:$true] %s19
      %25 = dma.hbm_to_vmem [thread:$0]  %s18, 256, %s20, [#allocation3], 128, 128, 8
    $region5: #{tpu_custom_call.1} parent=1 // pred_fallthru
      _
    // Predicated region
    $region6: #{tpu_custom_call.1} parent=1 // pred_check
      _
    $region7: #{tpu_custom_call.1} parent=1 // pred_check_branch
      %27 = sbr.rel (0) target = $region9
    $region8: #{tpu_custom_call.1} parent=1 // pred_region
      %29 = vsyncadd [#allocation6], 0
      %s31 = sshll.u32 %s1, 4
      %s32 = int_to_ptr.hbm [resolvable:$true] %s31
      %s33 = sshll.u32 [#allocation5], 4
      %s34 = int_to_ptr.vmem [resolvable:$true] %s33
      %36 = dma.hbm_to_vmem [thread:$0]  %s32, 128, %s34, [#allocation6]
    $region9: #{tpu_custom_call.1} parent=1 // pred_fallthru
      _
    // Predicated region
    $region10: #{tpu_custom_call.1} parent=1 // pred_check
      _
    $region11: #{tpu_custom_call.1} parent=1 // pred_check_branch
      %38 = sbr.rel (0) target = $region13
    $region12: #{tpu_custom_call.1} parent=1 // pred_region
      %40 = vsyncadd [#allocation6], 0
      %s41 = sshll.u32 %s2, 4
      %s42 = int_to_ptr.hbm [resolvable:$true] %s41
      %s43 = sshll.u32 [#allocation7], 4
      %s44 = int_to_ptr.vmem [resolvable:$true] %s43
      %49 = dma.hbm_to_vmem [thread:$0]  %s42, 2048, %s44, [#allocation6], 1024, 1024, 64
    $region13: #{tpu_custom_call.1} parent=1 // pred_fallthru
      _
    // Predicated region
    $region14: #{tpu_custom_call.1} parent=1 // pred_check
      _
    $region15: #{tpu_custom_call.1} parent=1 // pred_check_branch
      %51 = sbr.rel (0) target = $region17
    $region16: #{tpu_custom_call.1} parent=1 // pred_region
      %53 = dma.done [#allocation3], 256
    $region17: #{tpu_custom_call.1} parent=1 // pred_fallthru
      _
    // Predicated region
    $region18: #{tpu_custom_call.1} parent=1 // pred_check
      _
    $region19: #{tpu_custom_call.1} parent=1 // pred_check_branch
      %55 = sbr.rel (0) target = $region21
    $region20: #{tpu_custom_call.1} parent=1 // pred_region
      %57 = dma.done [#allocation6], 128
    $region21: #{tpu_custom_call.1} parent=1 // pred_fallthru
      _
    // Predicated region
    $region22: #{tpu_custom_call.1} parent=1 // pred_check
      _
    $region23: #{tpu_custom_call.1} parent=1 // pred_check_branch
      %59 = sbr.rel (0) target = $region25
    $region24: #{tpu_custom_call.1} parent=1 // pred_region
      %61 = dma.done [#allocation6], 2048
    $region25: #{tpu_custom_call.1} parent=1 // pred_fallthru
      _
    %v62 = vld [vmem:[#allocation2] sm:$0xff]
    %v63 = vld [vmem:[#allocation2 + $0x8] sm:$0xff]
    %v64 = vld [vmem:[#allocation5] sm:$0xff]
    %65 = vmatpush.xpose.msra.mxu0 0.0
    %66 = vmatpush.xpose.msra.mxu0 0.0
    %67 = vmatpush.xpose.msra.mxu0 0.0
    %68 = vmatpush.xpose.msra.mxu0 0.0
    %69 = vmatpush.xpose.msra.mxu0 0.0
    %70 = vmatpush.xpose.msra.mxu0 0.0
    %71 = vmatpush.xpose.msra.mxu0 0.0
    %72 = vmatpush.xpose.msra.mxu0 0.0
    %73 = vmatpush.xpose.msra.mxu0 0.0
    %74 = vmatpush.xpose.msra.mxu0 0.0
    %75 = vmatpush.xpose.msra.mxu0 0.0
    %76 = vmatpush.xpose.msra.mxu0 0.0
    %77 = vmatpush.xpose.msra.mxu0 0.0
    %78 = vmatpush.xpose.msra.mxu0 0.0
    %79 = vmatpush.xpose.msra.mxu0 0.0
    %80 = vmatpush.xpose.msra.mxu0 %v64
    %81 = vmatmul.f32.gmra.mxu0 %v62
    %v82 = vpop.f32.mrf.mxu0
    %v83 = vadd.f32 0.0, %v82
    %84 = vmatmul.f32.gmra.mxu0 %v63
    %v85 = vpop.f32.mrf.mxu0
    %v86 = vadd.f32 0.0, %v85
    %87 = vdwg.mxu0
    %vm88 = vcmask 64512
    %v89 = vsel %vm88, %v83, -inf
    %90 = vmax.xlane.f32.xlu0 %v89
    %v91 = vpop.xlane.xlu0 %90
    %v92 = vsel %vm88, %v86, -inf
    %93 = vmax.xlane.f32.xlu0 %v92
    %v94 = vpop.xlane.xlu0 %93
    %v95 = vsub.f32 %v83, %v91
    %v96 = vsub.f32 %v86, %v94
    %v97 = vmul.f32 %v95, 1.442695
    %v98 = vpow.pop %v97
    %v99 = vmul.f32 %v96, 1.442695
    %v100 = vpow.pop %v99
    %v101 = vsel %vm88, %v98, 0.0
    %102 = vadd.xlane.f32.xlu0 %v101
    %v103 = vpop.xlane.xlu0 %102
    %v104 = vsel %vm88, %v100, 0.0
    %105 = vadd.xlane.f32.xlu0 %v104
    %v106 = vpop.xlane.xlu0 %105
    %v107 = vrcp.pop %v103
    %v108 = vmul.f32 %v103, %v107
    %v109 = vsub.f32 1.0, %v108
    %v110 = vmul.f32 %v107, %v109
    %v111 = vadd.f32 %v107, %v110
    %vm112 = vweird.f32 %v103
    %vm113 = vweird.f32 %v107
    %vm114 = vmor %vm112, %vm113
    %v115 = vsel %vm114, %v107, %v111
    %v116 = vand.u32 2147483647, %v103
    %vm117 = vcmp.eq.f32.partialorder %v116, 8.507059e+37
    %v118 = vand.u32 %v103, 2147483648
    %v119 = vor.u32 1.1754944e-38, %v118
    %v120 = vsel %vm117, %v119, %v115
    %v121 = vmul.f32 %v98, %v120
    %v122 = vrcp.pop %v106
    %v123 = vmul.f32 %v106, %v122
    %v124 = vsub.f32 1.0, %v123
    %v125 = vmul.f32 %v122, %v124
    %v126 = vadd.f32 %v122, %v125
    %vm127 = vweird.f32 %v106
    %vm128 = vweird.f32 %v122
    %vm129 = vmor %vm127, %vm128
    %v130 = vsel %vm129, %v122, %v126
    %v131 = vand.u32 2147483647, %v106
    %vm132 = vcmp.eq.f32.partialorder %v131, 8.507059e+37
    %v133 = vand.u32 %v106, 2147483648
    %v134 = vor.u32 1.1754944e-38, %v133
    %v135 = vsel %vm132, %v134, %v130
    %v136 = vmul.f32 %v100, %v135
    %137 = vst.msk [vmem:[%s4] sm:$0xff] %vm88, %v121
    %138 = vst.msk [vmem:[%s4 + $0x8] sm:$0xff] %vm88, %v136
    %v139 = vld [vmem:[%s4] sm:$0xff]
    %v140 = vld [vmem:[%s4 + $0x8] sm:$0xff]
    %s141 = smul.u32 0, 8
    %s142 = smul.addr %s141, 8
    %s143 = scalar_lea.vmem [#allocation7], %s142
    %v144 = vld [vmem:[%s143] sm:$0xff]
    %v145 = vld [vmem:[%s143 + $0x40] sm:$0xff]
    %147 = vset.pattern.permute.xlu0 0
    %148 = vperm.xlu0 %147, %v139
    %v149 = vpop.permute.xlu0 %148
    %152 = vset.pattern.permute.xlu0 0
    %153 = vperm.xlu0 %152, %v140
    %v154 = vpop.permute.xlu0 %153
    %v156 = vmul.f32 %v149, %v144
    %v157 = vmul.f32 %v154, %v145
    %v158 = vld [vmem:[%s143 + $0x8] sm:$0xff]
    %v159 = vld [vmem:[%s143 + $0x48] sm:$0xff]
    %160 = vset.pattern.permute.xlu0 1
    %161 = vperm.xlu0 %160, %v139
    %v162 = vpop.permute.xlu0 %161
    %164 = vset.pattern.permute.xlu0 1
    %165 = vperm.xlu0 %164, %v140
    %v166 = vpop.permute.xlu0 %165
    %v168 = vmul.f32 %v162, %v158
    %v169 = vmul.f32 %v166, %v159
    %v170 = vadd.f32 %v156, %v168
    %v171 = vadd.f32 %v157, %v169
    %v172 = vld [vmem:[%s143 + $0x10] sm:$0xff]
    %v173 = vld [vmem:[%s143 + $0x50] sm:$0xff]
    %174 = vset.pattern.permute.xlu0 2
    %175 = vperm.xlu0 %174, %v139
    %v176 = vpop.permute.xlu0 %175
    %178 = vset.pattern.permute.xlu0 2
    %179 = vperm.xlu0 %178, %v140
    %v180 = vpop.permute.xlu0 %179
    %v182 = vmul.f32 %v176, %v172
    %v183 = vmul.f32 %v180, %v173
    %v184 = vadd.f32 %v170, %v182
    %v185 = vadd.f32 %v171, %v183
    %v186 = vld [vmem:[%s143 + $0x18] sm:$0xff]
    %v187 = vld [vmem:[%s143 + $0x58] sm:$0xff]
    %188 = vset.pattern.permute.xlu0 3
    %189 = vperm.xlu0 %188, %v139
    %v190 = vpop.permute.xlu0 %189
    %192 = vset.pattern.permute.xlu0 3
    %193 = vperm.xlu0 %192, %v140
    %v194 = vpop.permute.xlu0 %193
    %v196 = vmul.f32 %v190, %v186
    %v197 = vmul.f32 %v194, %v187
    %v198 = vadd.f32 %v184, %v196
    %v199 = vadd.f32 %v185, %v197
    %v200 = vld [vmem:[%s143 + $0x20] sm:$0xff]
    %v201 = vld [vmem:[%s143 + $0x60] sm:$0xff]
    %202 = vset.pattern.permute.xlu0 4
    %203 = vperm.xlu0 %202, %v139
    %v204 = vpop.permute.xlu0 %203
    %206 = vset.pattern.permute.xlu0 4
    %207 = vperm.xlu0 %206, %v140
    %v208 = vpop.permute.xlu0 %207
    %v210 = vmul.f32 %v204, %v200
    %v211 = vmul.f32 %v208, %v201
    %v212 = vadd.f32 %v198, %v210
    %v213 = vadd.f32 %v199, %v211
    %v214 = vld [vmem:[%s143 + $0x28] sm:$0xff]
    %v215 = vld [vmem:[%s143 + $0x68] sm:$0xff]
    %216 = vset.pattern.permute.xlu0 5
    %217 = vperm.xlu0 %216, %v139
    %v218 = vpop.permute.xlu0 %217
    %220 = vset.pattern.permute.xlu0 5
    %221 = vperm.xlu0 %220, %v140
    %v222 = vpop.permute.xlu0 %221
    %v224 = vmul.f32 %v218, %v214
    %v225 = vmul.f32 %v222, %v215
    %v226 = vadd.f32 %v212, %v224
    %v227 = vadd.f32 %v213, %v225
    %v228 = vld [vmem:[%s143 + $0x30] sm:$0xff]
    %v229 = vld [vmem:[%s143 + $0x70] sm:$0xff]
    %230 = vset.pattern.permute.xlu0 6
    %231 = vperm.xlu0 %230, %v139
    %v232 = vpop.permute.xlu0 %231
    %234 = vset.pattern.permute.xlu0 6
    %235 = vperm.xlu0 %234, %v140
    %v236 = vpop.permute.xlu0 %235
    %v238 = vmul.f32 %v232, %v228
    %v239 = vmul.f32 %v236, %v229
    %v240 = vadd.f32 %v226, %v238
    %v241 = vadd.f32 %v227, %v239
    %v242 = vld [vmem:[%s143 + $0x38] sm:$0xff]
    %v243 = vld [vmem:[%s143 + $0x78] sm:$0xff]
    %244 = vset.pattern.permute.xlu0 7
    %245 = vperm.xlu0 %244, %v139
    %v246 = vpop.permute.xlu0 %245
    %248 = vset.pattern.permute.xlu0 7
    %249 = vperm.xlu0 %248, %v140
    %v250 = vpop.permute.xlu0 %249
    %v252 = vmul.f32 %v246, %v242
    %v253 = vmul.f32 %v250, %v243
    %v254 = vadd.f32 %v240, %v252
    %v255 = vadd.f32 %v241, %v253
    %256 = vst [vmem:[#allocation8] sm:$0xff] %v254
    %257 = vst [vmem:[#allocation8 + $0x8] sm:$0xff] %v255
    // Predicated region
    $region26: #{tpu_custom_call.1} parent=1 // pred_check
      _
    $region27: #{tpu_custom_call.1} parent=1 // pred_check_branch
      %259 = sbr.rel (0) target = $region29
    $region28: #{tpu_custom_call.1} parent=1 // pred_region
      %261 = vsyncadd [#allocation4], 0
      %s262 = sshll.u32 [#allocation8], 4
      %s263 = int_to_ptr.vmem [resolvable:$true] %s262
      %s264 = sshll.u32 %s3, 4
      %s265 = int_to_ptr.hbm [resolvable:$true] %s264
      %270 = dma.vmem_to_hbm [thread:$0]  %s263, 256, %s265, [#allocation4], 128, 128, 8
    $region29: #{tpu_custom_call.1} parent=1 // pred_fallthru
      _
    // Predicated region
    $region30: #{tpu_custom_call.1} parent=1 // pred_check
      _
    $region31: #{tpu_custom_call.1} parent=1 // pred_check_branch
      %272 = sbr.rel (0) target = $region33
    $region32: #{tpu_custom_call.1} parent=1 // pred_region
      _
    $region33: #{tpu_custom_call.1} parent=1 // pred_fallthru
      _
    // Predicated region
    $region34: #{tpu_custom_call.1} parent=1 // pred_check
      _
    $region35: #{tpu_custom_call.1} parent=1 // pred_check_branch
      %274 = sbr.rel (0) target = $region37
    $region36: #{tpu_custom_call.1} parent=1 // pred_region
      %276 = dma.done [#allocation4], 256
    $region37: #{tpu_custom_call.1} parent=1 // pred_fallthru
      _
    // Predicated region
    $region38: #{tpu_custom_call.1} parent=1 // pred_check
      _
    $region39: #{tpu_custom_call.1} parent=1 // pred_check_branch
      %278 = sbr.rel (0) target = $region41
    $region40: #{tpu_custom_call.1} parent=1 // pred_region
      _
    $region41: #{tpu_custom_call.1} parent=1 // pred_fallthru
      _
    %279 = vsyncpa [#allocation3], 1
    %280 = vsyncpa [#allocation6], 1
    %281 = vsyncpa [#allocation4], 1

</llo_original>
